<compile_context>
chip_gen: v7x
topology: tpu7x:2x2x1
jax: 0.10.0
libtpu: 0.0.40
codegen_flags: <defaults>
</compile_context>

<pallas_src>
import jax
import jax.numpy as jnp
from jax.experimental import pallas as pl
from jax.experimental.pallas import tpu as pltpu


# ---------------------------------------------------------------------------
# Kernels
# ---------------------------------------------------------------------------

def _rsi_lowrank_kernel(base_ref, src_ref, wk_ref, wkt_ref, out_ref):
    """out = base + ((source - base) @ Wk) @ Wk.T for one (tm, Dp) row tile."""
    cdt = wk_ref.dtype
    # Subtract directly in the compute dtype (bf16 VALU on v6e/v7x; plain fp32
    # when compute_dtype == fp32) -- no fp32 round-trip temporaries.
    diff = src_ref[...].astype(cdt) - base_ref[...].astype(cdt)
    t = jnp.dot(diff, wk_ref[...], preferred_element_type=jnp.float32)      # (tm, Kp)
    proj = jnp.dot(t.astype(cdt), wkt_ref[...],
                   preferred_element_type=jnp.float32)                       # (tm, Dp)
    # Re-read base for the residual add (vld slots have slack under the MXU);
    # keeps vreg live ranges short across the two matmuls.
    out_ref[...] = (base_ref[...].astype(jnp.float32) + proj).astype(out_ref.dtype)


def _rsi_dense_kernel(base_ref, src_ref, p_ref, out_ref):
    """out[:, j-tile] = base[:, j-tile] + (source - base) @ P[:, j-tile]."""
    cdt = p_ref.dtype
    tn = out_ref.shape[-1]
    # diff is recomputed per column panel: cheap VALU filler under the MXU op.
    diff = src_ref[...].astype(cdt) - base_ref[...].astype(cdt)              # (tm, Dp)
    proj = jnp.dot(diff, p_ref[...], preferred_element_type=jnp.float32)     # (tm, tn)
    col0 = pl.multiple_of(pl.program_id(1) * tn, tn)
    b_cols = base_ref[:, pl.ds(col0, tn)].astype(jnp.float32)
    out_ref[...] = (b_cols + proj).astype(out_ref.dtype)


# ---------------------------------------------------------------------------
# Sizing helpers
# ---------------------------------------------------------------------------

def _round_up(x, m):
    return (x + m - 1) // m * m


_TM_CANDIDATES = (1024, 512, 256, 128, 64, 32, 16, 8)


def _pick_tm(avail_bytes, per_row_bytes):
    for cand in _TM_CANDIDATES:
        if cand * per_row_bytes <= avail_bytes:
            return cand
    return 8


def _vmem_limit_bytes():
    """Generation-aware VMEM limit (v5e/v6e: ~108 of 128 MiB; v7x: ~54 of 64)."""
    cap = None
    try:
        cap = getattr(pltpu.get_tpu_info(), "vmem_capacity_bytes", None)
    except Exception:
        cap = None
    if not cap:
        cap = 64 * 1024 * 1024            # conservative default (v7x per-core size)
    return min(int(cap * 0.85), 110 * 1024 * 1024)


# ---------------------------------------------------------------------------
# Wrapper
# ---------------------------------------------------------------------------

def rotated_space_intervention(base, source, weight, intervention_dim=None, *,
                               intervention_mask=None, compute_dtype=None,
                               row_tile=None):
    """Forward pass of RotatedSpaceIntervention.

        output = base + (source - base) @ W @ diag(m) @ W.T

    Precondition: W is orthogonal (W @ W.T == I), as guaranteed by the torch
    orthogonal parametrization; a non-orthogonal / quantized W would diverge
    from the 3-matmul reference.

    intervention_dim:  static int k; mask = ones on the first k dims (module
                       default). Enables the low-rank path with Wk = W[:, :k].
    intervention_mask: optional explicit (D,) mask; forces the dense-projector
                       path P = W @ diag(m) @ W.T.
    compute_dtype:     dtype fed to the MXU (bf16 recommended on v6e/v7x);
                       output keeps base.dtype.
    row_tile:          optional cap on the row-tile size (mostly for tests).
    """
    B, S, D = base.shape
    out_dtype = base.dtype
    in_dtype = base.dtype
    compute_dtype = jnp.dtype(compute_dtype if compute_dtype is not None
                              else base.dtype)

    M = B * S
    Dp = _round_up(D, 128)
    hp = jax.lax.Precision.HIGHEST          # keep projector precompute exact fp32
    w32 = weight.astype(jnp.float32)

    in_b = jnp.dtype(in_dtype).itemsize
    out_b = jnp.dtype(out_dtype).itemsize
    c_b = compute_dtype.itemsize
    vmem_limit = _vmem_limit_bytes()
    budget = int(vmem_limit * 0.8)          # headroom for Mosaic scratch / sems

    # ---- factorized / dense weights ---------------------------------------
    use_lowrank = False
    wk = wkt = proj = None
    Kp = None
    if intervention_mask is None:
        if intervention_dim is None:
            raise ValueError("pass intervention_dim (int) or intervention_mask")
        k = int(intervention_dim)
        Kp = _round_up(max(k, 1), 128)
        lowrank_fixed = 2 * Dp * Kp * c_b   # Wk + Wk.T resident in VMEM
        # Low-rank only when it is both cheaper than dense and fits comfortably.
        use_lowrank = (Kp < Dp) and (lowrank_fixed <= budget // 2)
        wk32 = w32[:, :k]                   # mask = first k rotated dimensions
        if use_lowrank:
            wk = jnp.pad(wk32, ((0, Dp - D), (0, Kp - k))).astype(compute_dtype)
            wkt = jnp.pad(wk32.T, ((0, Kp - k), (0, Dp - D))).astype(compute_dtype)
        else:
            proj = jnp.matmul(wk32, wk32.T, precision=hp)
    else:
        m32 = intervention_mask.reshape(-1).astype(jnp.float32)
        proj = jnp.matmul(w32 * m32[None, :], w32.T, precision=hp)
    if not use_lowrank:
        # Zero-padding P and the input columns keeps the math exact.
        proj = jnp.pad(proj, ((0, Dp - D), (0, Dp - D))).astype(compute_dtype)

    # ---- tile sizing --------------------------------------------------------
    if use_lowrank:
        tn = None
        fixed = 2 * Dp * Kp * c_b           # single-buffered resident weights
        per_row = (4 * Dp * in_b            # base+src rows, double-buffered
                   + 2 * Dp * out_b         # out row, double-buffered
                   + Dp * (c_b + 8)         # diff + fp32 proj / residual temps
                   + Kp * 8)                # fp32 (tm, Kp) intermediate
        tm = _pick_tm(budget - fixed, per_row)
    else:
        tn_cands = [t for t in range(Dp, 0, -128) if Dp % t == 0]
        tm = tn = None
        for want in (256, 128, 8):          # prefer MXU-sized row tiles
            for t in tn_cands:              # prefer the widest P panel that fits
                fixed = 2 * Dp * t * c_b    # double-buffered P panel
                per_row = (4 * Dp * in_b + 2 * t * out_b + Dp * c_b + t * 8)
                cand = _pick_tm(budget - fixed, per_row) if budget > fixed else 0
                if cand >= want:
                    tm, tn = cand, t
                    break
            if tm is not None:
                break
        if tm is None:
            tm, tn = 8, 128

    if row_tile is not None:
        tm = max(8, min(tm, _round_up(int(row_tile), 8)))
    if M >= 256:
        # Keep the row grid >= 2 steps so both v7x TensorCores get work.
        tm = min(tm, _round_up(-(-M // 2), 128))
    tm = min(tm, _round_up(M, 8))
    Mp = _round_up(M, tm)

    # ---- inputs: pad only when needed; cast to compute dtype in-kernel ------
    base2d = base.reshape(M, D)
    src2d = source.reshape(M, D)
    if Mp != M or Dp != D:
        base2d = jnp.pad(base2d, ((0, Mp - M), (0, Dp - D)))
        src2d = jnp.pad(src2d, ((0, Mp - M), (0, Dp - D)))

    grid_rows = Mp // tm

    def run(single_buffer_weights):
        def resident(shape, index_map):
            if single_buffer_weights:
                return pl.BlockSpec(shape, index_map, pipeline_mode=pl.Buffered(1))
            return pl.BlockSpec(shape, index_map)

        if use_lowrank:
            grid = (grid_rows,)
            in_specs = [
                pl.BlockSpec((tm, Dp), lambda i: (i, 0)),         # base rows
                pl.BlockSpec((tm, Dp), lambda i: (i, 0)),         # source rows
                resident((Dp, Kp), lambda i: (0, 0)),             # Wk   (resident)
                resident((Kp, Dp), lambda i: (0, 0)),             # Wk.T (resident)
            ]
            out_spec = pl.BlockSpec((tm, Dp), lambda i: (i, 0))
            operands = (base2d, src2d, wk, wkt)
            kernel = _rsi_lowrank_kernel
            dims = ("parallel",)
        else:
            grid = (grid_rows, Dp // tn)
            if tn == Dp:                                          # P fully resident
                p_spec = resident((Dp, tn), lambda i, j: (0, j))
            else:                                                 # panel-tiled P
                p_spec = pl.BlockSpec((Dp, tn), lambda i, j: (0, j))
            in_specs = [
                pl.BlockSpec((tm, Dp), lambda i, j: (i, 0)),      # resident over j
                pl.BlockSpec((tm, Dp), lambda i, j: (i, 0)),
                p_spec,
            ]
            out_spec = pl.BlockSpec((tm, tn), lambda i, j: (i, j))
            operands = (base2d, src2d, proj)
            kernel = _rsi_dense_kernel
            dims = ("parallel", "parallel")

        return pl.pallas_call(
            kernel,
            out_shape=jax.ShapeDtypeStruct((Mp, Dp), out_dtype),
            grid_spec=pltpu.PrefetchScalarGridSpec(
                num_scalar_prefetch=0,
                grid=grid,
                in_specs=in_specs,
                out_specs=out_spec,
            ),
            compiler_params=pltpu.CompilerParams(
                dimension_semantics=dims,
                vmem_limit_bytes=vmem_limit,
            ),
        )(*operands)

    try:
        out2d = run(True)
    except Exception:
        # pipeline_mode=pl.Buffered(1) not supported by this jax version:
        # fall back to default double-buffering of the resident weights.
        out2d = run(False)

    if Mp != M or Dp != D:
        out2d = out2d[:M, :D]
    # TODO(synk): return_basis=True (rotated_base = base @ W) is not emitted;
    # it would need W itself as an extra kernel input and a second output.
    return out2d.reshape(B, S, D)


# ---------------------------------------------------------------------------
# Reference (mirrors the PyTorch 3-matmul forward) and self-test
# ---------------------------------------------------------------------------

def _reference(base, source, weight, k):
    hp = jax.lax.Precision.HIGHEST
    m = jnp.zeros((weight.shape[0],), jnp.float32).at[:k].set(1.0).reshape(1, 1, -1)
    rb = jnp.matmul(base, weight, precision=hp)
    rs = jnp.matmul(source, weight, precision=hp)
    mixed = (1.0 - m) * rb + m * rs
    return jnp.matmul(mixed, weight.T, precision=hp)


def _make_orthogonal(key, n):
    a = jax.random.normal(key, (n, n), dtype=jnp.float32)
    q, r = jnp.linalg.qr(a)
    q = q * jnp.sign(jnp.diag(r))[None, :]
    # One Newton-Schulz polish in true fp32 so W W.T == I holds to ~1e-7 per
    # entry -- the algebraic fold inside the kernel relies on orthogonality.
    hp = jax.lax.Precision.HIGHEST
    qtq = jnp.matmul(q.T, q, precision=hp)
    return 0.5 * jnp.matmul(q, 3.0 * jnp.eye(n, dtype=q.dtype) - qtq, precision=hp)


if __name__ == "__main__":
    key = jax.random.PRNGKey(0)
    k1, k2, k3, k4, k5, k6 = jax.random.split(key, 6)

    # --- Test 1: dense-projector path (embed_dim=32, intervention_dim=8) ----
    B, S, D, K = 2, 8, 32, 8
    base = jax.random.normal(k1, (B, S, D), dtype=jnp.float32)
    source = jax.random.normal(k2, (B, S, D), dtype=jnp.float32)
    w = _make_orthogonal(k3, D)
    ref = _reference(base, source, w, K)

    # row_tile=8 forces a 2-step row grid even at this toy size so the
    # pipelined / multi-step path is exercised.
    out = rotated_space_intervention(base, source, w, K, row_tile=8)
    out = jax.block_until_ready(out)
    assert out.shape == (B, S, D) and out.dtype == base.dtype
    assert jnp.allclose(out, ref, atol=5e-4, rtol=5e-4)

    # --- Test 2: low-rank Wk path (embed_dim=256, intervention_dim=16) ------
    B2, S2, D2, K2 = 2, 8, 256, 16
    base2 = jax.random.normal(k4, (B2, S2, D2), dtype=jnp.float32)
    source2 = jax.random.normal(k5, (B2, S2, D2), dtype=jnp.float32)
    w2 = _make_orthogonal(k6, D2)
    ref2 = _reference(base2, source2, w2, K2)

    out2 = jax.block_until_ready(
        rotated_space_intervention(base2, source2, w2, K2))
    assert out2.shape == (B2, S2, D2) and out2.dtype == base2.dtype
    assert jnp.allclose(out2, ref2, atol=5e-4, rtol=5e-4)

    # --- Test 3: bf16 MXU path (recommended on v6e/v7x), loose check --------
    out_bf16 = jax.block_until_ready(
        rotated_space_intervention(base2, source2, w2, K2,
                                   compute_dtype=jnp.bfloat16))
    assert out_bf16.shape == (B2, S2, D2) and out_bf16.dtype == base2.dtype
    assert float(jnp.max(jnp.abs(out_bf16.astype(jnp.float32) - ref2))) < 0.5

    # --- Test 4: explicit-mask (dense) path matches the module semantics ----
    mask = jnp.zeros((D,), jnp.float32).at[:K].set(1.0)
    out_m = jax.block_until_ready(
        rotated_space_intervention(base, source, w, intervention_mask=mask))
    assert jnp.allclose(out_m, ref, atol=5e-4, rtol=5e-4)

    print("KERNEL_OK")
</pallas_src>

<mosaic_0001>
module attributes {stable_mosaic.version = 11 : i64} {
  func.func @_rsi_dense_kernel(%arg0: i32, %arg1: i32, %arg2: memref<8x128xf32, #tpu.memory_space<vmem>>, %arg3: memref<8x128xf32, #tpu.memory_space<vmem>>, %arg4: memref<128x128xf32, #tpu.memory_space<vmem>>, %arg5: memref<8x128xf32, #tpu.memory_space<vmem>>) attributes {dimension_semantics = [#tpu.dimension_semantics<parallel>, #tpu.dimension_semantics<parallel>], iteration_bounds = array<i64: 2, 1>, scalar_prefetch = 0 : i64, scratch_operands = 0 : i64, tpu.core_type = #tpu.core_type<tc>, window_params = [{transform_indices = @transform_0, window_bounds = array<i64: 8, 128>}, {transform_indices = @transform_1, window_bounds = array<i64: 8, 128>}, {pipeline_mode = #tpu.pipeline_mode<synchronous>, transform_indices = @transform_2, window_bounds = array<i64: 128, 128>}, {transform_indices = @transform_3, window_bounds = array<i64: 8, 128>}]} {
    %c0 = arith.constant 0 : index
    %c0_0 = arith.constant 0 : index
    %0 = vector.load %arg3[%c0, %c0_0] : memref<8x128xf32, #tpu.memory_space<vmem>>, vector<8x128xf32>
    %c0_1 = arith.constant 0 : index
    %c0_2 = arith.constant 0 : index
    %1 = vector.load %arg2[%c0_1, %c0_2] : memref<8x128xf32, #tpu.memory_space<vmem>>, vector<8x128xf32>
    %2 = arith.subf %0, %1 : vector<8x128xf32>
    %c0_3 = arith.constant 0 : index
    %c0_4 = arith.constant 0 : index
    %3 = vector.load %arg4[%c0_3, %c0_4] : memref<128x128xf32, #tpu.memory_space<vmem>>, vector<128x128xf32>
    %cst = arith.constant dense<0.000000e+00> : vector<8x128xf32>
    %4 = tpu.matmul %2, %3, %cst {dimension_numbers = #tpu.dot_dimension_numbers<[1], [0], [0], [1], [0, 0, 1, 1], [], []>} : vector<8x128xf32>, vector<128x128xf32>, vector<8x128xf32> -> vector<8x128xf32>
    %c128_i32 = arith.constant 128 : i32
    %5 = arith.muli %arg1, %c128_i32 : i32
    %6 = tpu.assume_multiple %5, 128 : i32
    %c0_5 = arith.constant 0 : index
    %7 = arith.index_cast %6 : i32 to index
    %8 = vector.load %arg2[%c0_5, %7] : memref<8x128xf32, #tpu.memory_space<vmem>>, vector<8x128xf32>
    %9 = arith.addf %8, %4 : vector<8x128xf32>
    %c0_6 = arith.constant 0 : index
    %c0_7 = arith.constant 0 : index
    %10 = vector.load %arg5[%c0_6, %c0_7] : memref<8x128xf32, #tpu.memory_space<vmem>>, vector<8x128xf32>
    tpu.vector_store %arg5[%c0_6, %c0_7], %9 {strides = array<i32>} : memref<8x128xf32, #tpu.memory_space<vmem>>, vector<8x128xf32>,
    return
  }
  func.func @transform_0(%arg0: i32, %arg1: i32) -> (i32, i32) {
    %c0_i32 = arith.constant 0 : i32
    %c0_i32_0 = arith.constant 0 : i32
    return %arg0, %c0_i32 : i32, i32
  }
  func.func @transform_1(%arg0: i32, %arg1: i32) -> (i32, i32) {
    %c0_i32 = arith.constant 0 : i32
    %c0_i32_0 = arith.constant 0 : i32
    return %arg0, %c0_i32 : i32, i32
  }
  func.func @transform_2(%arg0: i32, %arg1: i32) -> (i32, i32) {
    %c0_i32 = arith.constant 0 : i32
    %c0_i32_0 = arith.constant 0 : i32
    return %c0_i32, %arg1 : i32, i32
  }
  func.func @transform_3(%arg0: i32, %arg1: i32) -> (i32, i32) {
    %c0_i32 = arith.constant 0 : i32
    return %arg0, %arg1 : i32, i32
  }
}

module attributes {stable_mosaic.version = 11 : i64} {
  func.func @_rsi_dense_kernel(%arg0: i32, %arg1: i32, %arg2: memref<8x128xf32, #tpu.memory_space<vmem>>, %arg3: memref<8x128xf32, #tpu.memory_space<vmem>>, %arg4: memref<128x128xf32, #tpu.memory_space<vmem>>, %arg5: memref<8x128xf32, #tpu.memory_space<vmem>>) attributes {dimension_semantics = [#tpu.dimension_semantics<parallel>, #tpu.dimension_semantics<parallel>], iteration_bounds = array<i64: 2, 1>, scalar_prefetch = 0 : i64, scratch_operands = 0 : i64, tpu.core_type = #tpu.core_type<tc>, window_params = [{transform_indices = @transform_0, window_bounds = array<i64: 8, 128>}, {transform_indices = @transform_1, window_bounds = array<i64: 8, 128>}, {transform_indices = @transform_2, window_bounds = array<i64: 128, 128>}, {transform_indices = @transform_3, window_bounds = array<i64: 8, 128>}]} {
    %c0 = arith.constant 0 : index
    %c0_0 = arith.constant 0 : index
    %0 = vector.load %arg3[%c0, %c0_0] : memref<8x128xf32, #tpu.memory_space<vmem>>, vector<8x128xf32>
    %c0_1 = arith.constant 0 : index
    %c0_2 = arith.constant 0 : index
    %1 = vector.load %arg2[%c0_1, %c0_2] : memref<8x128xf32, #tpu.memory_space<vmem>>, vector<8x128xf32>
    %2 = arith.subf %0, %1 : vector<8x128xf32>
    %c0_3 = arith.constant 0 : index
    %c0_4 = arith.constant 0 : index
    %3 = vector.load %arg4[%c0_3, %c0_4] : memref<128x128xf32, #tpu.memory_space<vmem>>, vector<128x128xf32>
    %cst = arith.constant dense<0.000000e+00> : vector<8x128xf32>
    %4 = tpu.matmul %2, %3, %cst {dimension_numbers = #tpu.dot_dimension_numbers<[1], [0], [0], [1], [0, 0, 1, 1], [], []>} : vector<8x128xf32>, vector<128x128xf32>, vector<8x128xf32> -> vector<8x128xf32>
    %c128_i32 = arith.constant 128 : i32
    %5 = arith.muli %arg1, %c128_i32 : i32
    %6 = tpu.assume_multiple %5, 128 : i32
    %c0_5 = arith.constant 0 : index
    %7 = arith.index_cast %6 : i32 to index
    %8 = vector.load %arg2[%c0_5, %7] : memref<8x128xf32, #tpu.memory_space<vmem>>, vector<8x128xf32>
    %9 = arith.addf %8, %4 : vector<8x128xf32>
    %c0_6 = arith.constant 0 : index
    %c0_7 = arith.constant 0 : index
    %10 = vector.load %arg5[%c0_6, %c0_7] : memref<8x128xf32, #tpu.memory_space<vmem>>, vector<8x128xf32>
    tpu.vector_store %arg5[%c0_6, %c0_7], %9 {strides = array<i32>} : memref<8x128xf32, #tpu.memory_space<vmem>>, vector<8x128xf32>,
    return
  }
  func.func @transform_0(%arg0: i32, %arg1: i32) -> (i32, i32) {
    %c0_i32 = arith.constant 0 : i32
    %c0_i32_0 = arith.constant 0 : i32
    return %arg0, %c0_i32 : i32, i32
  }
  func.func @transform_1(%arg0: i32, %arg1: i32) -> (i32, i32) {
    %c0_i32 = arith.constant 0 : i32
    %c0_i32_0 = arith.constant 0 : i32
    return %arg0, %c0_i32 : i32, i32
  }
  func.func @transform_2(%arg0: i32, %arg1: i32) -> (i32, i32) {
    %c0_i32 = arith.constant 0 : i32
    %c0_i32_0 = arith.constant 0 : i32
    return %c0_i32, %arg1 : i32, i32
  }
  func.func @transform_3(%arg0: i32, %arg1: i32) -> (i32, i32) {
    %c0_i32 = arith.constant 0 : i32
    return %arg0, %arg1 : i32, i32
  }
}

</mosaic_0001>

<llo_original>
// kernel: tpu_custom_call.1
$region0: #{tpu_custom_call.1}
  #allocation0 [shape = 'u32[]', space=smem, size = 0x4, offset = 0x4, fixed_abs, tag = 'smem constant byte address 0x4 - core index']
  #allocation1 [shape = 'u32[144,128]{1,0:T(1,128)}', space=vmem, size = 0x12000, scoped, tag = 'internal scratch']
  %s0 = inlined_call_operand.hbm [shape: f32[16,128], index: 0, kind: input, shape index: {}]
  %s1 = inlined_call_operand.hbm [shape: f32[16,128], index: 1, kind: input, shape index: {}]
  %s2 = inlined_call_operand.hbm [shape: f32[128,128], index: 2, kind: input, shape index: {}]
  %s3 = inlined_call_operand.hbm [shape: f32[16,128], index: 3, kind: output, shape index: {}]
  %s4 = sld [smem:[#allocation0]]
  $region57: #{tpu_custom_call.1} parent=0
    _
  %s6 = ssub.s32 1, %s4
  %s7 = scalar_select 0, %s6, %s4
  $region1: #{tpu_custom_call.1} parent=0
    #allocation2 [shape = 'u8[8192]{0}', space=vmem, size = 0x2000, scoped, tag = 'input window, operand 0']
    #allocation3 [shape = 's32[2]{0}', space=sflag, size = 0x8, scoped, tag = 'scoped memory for tpu_custom_call.1']
    #allocation4 [shape = 's32[2]{0}', space=sflag, size = 0x8, scoped, tag = 'scoped memory for tpu_custom_call.1']
    #allocation5 [shape = 'u8[8192]{0}', space=vmem, size = 0x2000, scoped, tag = 'input window, operand 1']
    #allocation6 [shape = 's32[2]{0}', space=sflag, size = 0x8, scoped, tag = 'scoped memory for tpu_custom_call.1']
    #allocation7 [shape = 'u8[65536]{0}', space=vmem, size = 0x10000, scoped, tag = 'input window, operand 2, single buffered']
    #allocation8 [shape = 'u8[8192]{0}', space=vmem, size = 0x2000, scoped, tag = 'output window, operand 0']
    %8 = vsyncpa [#allocation3], 0
    %s9 = scalar_lea.sflag [#allocation3], 1
    %10 = vsyncpa %s9, 0
    %11 = vsyncpa [#allocation6], 0
    %s12 = scalar_lea.sflag [#allocation6], 1
    %13 = vsyncpa %s12, 0
    %14 = vsyncpa [#allocation4], 0
    %s15 = scalar_lea.sflag [#allocation4], 1
    %16 = vsyncpa %s15, 0
    loop: start=0, step=1, limit=4
    $region2: #{tpu_custom_call.1} parent=1 // loop_pre_header
      _
    $region3: #{tpu_custom_call.1} parent=1 // loop_header
      %s18 = sphi 0, %s22
      %p19 = scmp.ge.s32.totalorder %s18, 4
      %s25 = sphi 0, %s37
      %s26 = sphi 0, %s33
      %s27 = sphi 0, %s25
      %s28 = sphi 0, %s26
      %s29 = sphi 0, %s27
      %s30 = sphi 0, %s28
      %s40 = sphi 0, %s42
      %s43 = sphi 0, %s40
      %s44 = sphi 0, %s43
      %s60 = sphi 0, %s44
      %s66 = sphi 0, %s68
      %s69 = sphi 0, %s66
      %s70 = sphi 0, %s69
      %s86 = sphi 0, %s70
      %s92 = sphi 0, %s94
      %s95 = sphi 0, %s92
      %s96 = sphi 0, %s95
      %s112 = sphi 0, %s96
      %s120 = sphi 0, %s122
      %s123 = sphi 0, %s120
      %s124 = sphi 0, %s123
      %s140 = sphi 0, %s124
    $region4: #{tpu_custom_call.1} parent=1 // loop_header_branch
      %21 = sbr.rel (%p19) target = $region8
    $region5: #{tpu_custom_call.1} parent=1 // loop_body
      %s23 = ssub.s32 %s18, 1
      %s24 = ssub.s32 %s18, 2
      %s31 = sadd.s32 1, %s26
      %p32 = scmp.ge.s32.totalorder %s31, 1
      %s33 = scalar_select %p32, 0, %s31
      %s34 = sadd.s32 1, %s25
      %s35 = scalar_select %p32, %s34, %s25
      %p36 = scmp.ge.s32.totalorder %s35, 2
      %s37 = scalar_select %p36, 0, %s35
      %s38 = ssub.s32 %s25, %s37
      %p39 = scmp.eq.s32.totalorder %s38, 0
      %s41 = sadd.s32 %s40, 1
      %s42 = scalar_select %p39, %s40, %s41
      %p45 = pneg %p39
      %p46 = scmp.eq.s32.totalorder %s18, 1
      %p47 = por %p45, %p46
      %p48 = scmp.ne.s32.totalorder %s40, %s43
      %p49 = scmp.eq.s32.totalorder %s18, 0
      %p50 = por %p48, %p49
      %p51 = scmp.ne.s32.totalorder %s40, %s43
      %p52 = scmp.eq.s32.totalorder %s23, 1
      %p53 = por %p51, %p52
      %p54 = scmp.ne.s32.totalorder %s43, %s44
      %p55 = scmp.eq.s32.totalorder %s23, 0
      %p56 = por %p54, %p55
      %p57 = scmp.ne.s32.totalorder %s43, %s44
      %p58 = scmp.eq.s32.totalorder %s24, 1
      %p59 = por %p57, %p58
      %p61 = scmp.ne.s32.totalorder %s44, %s60
      %p62 = scmp.eq.s32.totalorder %s24, 0
      %p63 = por %p61, %p62
      %s64 = ssub.s32 %s25, %s37
      %p65 = scmp.eq.s32.totalorder %s64, 0
      %s67 = sadd.s32 %s66, 1
      %s68 = scalar_select %p65, %s66, %s67
      %p71 = pneg %p65
      %p72 = scmp.eq.s32.totalorder %s18, 1
      %p73 = por %p71, %p72
      %p74 = scmp.ne.s32.totalorder %s66, %s69
      %p75 = scmp.eq.s32.totalorder %s18, 0
      %p76 = por %p74, %p75
      %p77 = scmp.ne.s32.totalorder %s66, %s69
      %p78 = scmp.eq.s32.totalorder %s23, 1
      %p79 = por %p77, %p78
      %p80 = scmp.ne.s32.totalorder %s69, %s70
      %p81 = scmp.eq.s32.totalorder %s23, 0
      %p82 = por %p80, %p81
      %p83 = scmp.ne.s32.totalorder %s69, %s70
      %p84 = scmp.eq.s32.totalorder %s24, 1
      %p85 = por %p83, %p84
      %p87 = scmp.ne.s32.totalorder %s70, %s86
      %p88 = scmp.eq.s32.totalorder %s24, 0
      %p89 = por %p87, %p88
      %s90 = ssub.s32 %s26, %s33
      %p91 = scmp.eq.s32.totalorder %s90, 0
      %s93 = sadd.s32 %s92, 1
      %s94 = scalar_select %p91, %s92, %s93
      %p97 = pneg %p91
      %p98 = scmp.eq.s32.totalorder %s18, 1
      %p99 = por %p97, %p98
      %p100 = scmp.ne.s32.totalorder %s92, %s95
      %p101 = scmp.eq.s32.totalorder %s18, 0
      %p102 = por %p100, %p101
      %p103 = scmp.ne.s32.totalorder %s92, %s95
      %p104 = scmp.eq.s32.totalorder %s23, 1
      %p105 = por %p103, %p104
      %p106 = scmp.ne.s32.totalorder %s95, %s96
      %p107 = scmp.eq.s32.totalorder %s23, 0
      %p108 = por %p106, %p107
      %p109 = scmp.ne.s32.totalorder %s95, %s96
      %p110 = scmp.eq.s32.totalorder %s24, 1
      %p111 = por %p109, %p110
      %p113 = scmp.ne.s32.totalorder %s96, %s112
      %p114 = scmp.eq.s32.totalorder %s24, 0
      %p115 = por %p113, %p114
      %s116 = ssub.s32 %s25, %s37
      %s117 = ssub.s32 %s26, %s33
      %s118 = sor.u32 %s116, %s117
      %p119 = scmp.eq.s32.totalorder %s118, 0
      %s121 = sadd.s32 %s120, 1
      %s122 = scalar_select %p119, %s120, %s121
      %p125 = pneg %p119
      %p126 = scmp.eq.s32.totalorder %s18, 1
      %p127 = por %p125, %p126
      %p128 = scmp.ne.s32.totalorder %s120, %s123
      %p129 = scmp.eq.s32.totalorder %s18, 0
      %p130 = por %p128, %p129
      %p131 = scmp.ne.s32.totalorder %s120, %s123
      %p132 = scmp.eq.s32.totalorder %s23, 1
      %p133 = por %p131, %p132
      %p134 = scmp.ne.s32.totalorder %s123, %s124
      %p135 = scmp.eq.s32.totalorder %s23, 0
      %p136 = por %p134, %p135
      %p137 = scmp.ne.s32.totalorder %s123, %s124
      %p138 = scmp.eq.s32.totalorder %s24, 1
      %p139 = por %p137, %p138
      %p141 = scmp.ne.s32.totalorder %s124, %s140
      %p142 = scmp.eq.s32.totalorder %s24, 0
      %p143 = por %p141, %p142
      %p144 = scmp.le.s32.totalorder 1, %s18
      %p145 = scmp.lt.s32.totalorder %s18, 3
      %p146 = pnand %p144, %p145
      %p147 = pneg %p146
      // Predicated region
      $region9: #{tpu_custom_call.1} parent=5 // pred_check
        _
      $region10: #{tpu_custom_call.1} parent=5 // pred_check_branch
        %149 = sbr.rel (%p146) target = $region12
      $region11: #{tpu_custom_call.1} parent=5 // pred_region
        %s150 = ssub.s32 %s18, 1
        // Predicated region
        $region13: #{tpu_custom_call.1} parent=11 // pred_check
          %p151 = pneg %p108
        $region14: #{tpu_custom_call.1} parent=11 // pred_check_branch
          %153 = sbr.rel (%p151) target = $region16
        $region15: #{tpu_custom_call.1} parent=11 // pred_region
          %s155 = ssub.s32 2048, 2048
          %156 = vsyncadd [#allocation6], %s155
          %s157 = smul.addr %s28, 128
          %s158 = scalar_lea.hbm %s2, %s157
          %s159 = sshll.u32 [#allocation7], 4
          %s160 = int_to_ptr.vmem [resolvable:$true] %s159
          %165 = dma.hbm_to_vmem [thread:$0]  %s158, 2048, %s160, [#allocation6], 128, 128, 8
        $region16: #{tpu_custom_call.1} parent=11 // pred_fallthru
          _
      $region12: #{tpu_custom_call.1} parent=5 // pred_fallthru
        _
      %p166 = scmp.lt.s32.totalorder %s18, 2
      // Predicated region
      $region17: #{tpu_custom_call.1} parent=5 // pred_check
        %p167 = pneg %p166
      $region18: #{tpu_custom_call.1} parent=5 // pred_check_branch
        %169 = sbr.rel (%p167) target = $region20
      $region19: #{tpu_custom_call.1} parent=5 // pred_region
        // Predicated region
        $region21: #{tpu_custom_call.1} parent=19 // pred_check
          %p170 = pneg %p50
        $region22: #{tpu_custom_call.1} parent=19 // pred_check_branch
          %172 = sbr.rel (%p170) target = $region24
        $region23: #{tpu_custom_call.1} parent=19 // pred_region
          %s173 = sand.u32 %s40, 1
          %s174 = scalar_lea.sflag [#allocation3], %s173
          %s175 = sand.u32 %s40, 1
          %s176 = smul.addr %s175, 8
          %s177 = scalar_lea.vmem [#allocation2], %s176
          %s179 = ssub.s32 128, 128
          %180 = vsyncadd %s174, %s179
          %s181 = smul.addr %s25, 128
          %s182 = scalar_lea.hbm %s0, %s181
          %s184 = sshll.u32 %s177, 4
          %s185 = int_to_ptr.vmem [resolvable:$true] %s184
          %187 = dma.hbm_to_vmem [thread:$0]  %s182, 128, %s185, %s174
        $region24: #{tpu_custom_call.1} parent=19 // pred_fallthru
          _
        // Predicated region
        $region25: #{tpu_custom_call.1} parent=19 // pred_check
          %p188 = pneg %p76
        $region26: #{tpu_custom_call.1} parent=19 // pred_check_branch
          %190 = sbr.rel (%p188) target = $region28
        $region27: #{tpu_custom_call.1} parent=19 // pred_region
          %s191 = sand.u32 %s18, 1
          %s192 = scalar_lea.sflag [#allocation6], %s191
          %s193 = sand.u32 %s66, 1
          %s194 = smul.addr %s193, 8
          %s195 = scalar_lea.vmem [#allocation5], %s194
          %s197 = ssub.s32 128, 128
          %198 = vsyncadd %s192, %s197
          %s199 = smul.addr %s25, 128
          %s200 = scalar_lea.hbm %s1, %s199
          %s202 = sshll.u32 %s195, 4
          %s203 = int_to_ptr.vmem [resolvable:$true] %s202
          %205 = dma.hbm_to_vmem [thread:$0]  %s200, 128, %s203, %s192
        $region28: #{tpu_custom_call.1} parent=19 // pred_fallthru
          _
      $region20: #{tpu_custom_call.1} parent=5 // pred_fallthru
        _
      %p206 = scmp.le.s32.totalorder 1, %s18
      %p207 = scmp.lt.s32.totalorder %s18, 3
      %p208 = pnand %p206, %p207
      %p209 = pneg %p208
      // Predicated region
      $region29: #{tpu_custom_call.1} parent=5 // pred_check
        _
      $region30: #{tpu_custom_call.1} parent=5 // pred_check_branch
        %211 = sbr.rel (%p208) target = $region32
      $region31: #{tpu_custom_call.1} parent=5 // pred_region
        %s212 = ssub.s32 %s18, 1
        %s213 = sand.u32 %s43, 1
        %s214 = scalar_lea.sflag [#allocation3], %s213
        %s215 = sand.u32 %s43, 1
        %s216 = smul.addr %s215, 8
        %s217 = scalar_lea.vmem [#allocation2], %s216
        // Predicated region
        $region33: #{tpu_custom_call.1} parent=31 // pred_check
          %p218 = pneg %p56
        $region34: #{tpu_custom_call.1} parent=31 // pred_check_branch
          %220 = sbr.rel (%p218) target = $region36
        $region35: #{tpu_custom_call.1} parent=31 // pred_region
          %221 = dma.done %s214, 128
        $region36: #{tpu_custom_call.1} parent=31 // pred_fallthru
          _
        %s222 = sand.u32 %s23, 1
        %s223 = scalar_lea.sflag [#allocation6], %s222
        %s224 = sand.u32 %s69, 1
        %s225 = smul.addr %s224, 8
        %s226 = scalar_lea.vmem [#allocation5], %s225
        // Predicated region
        $region37: #{tpu_custom_call.1} parent=31 // pred_check
          %p227 = pneg %p82
        $region38: #{tpu_custom_call.1} parent=31 // pred_check_branch
          %229 = sbr.rel (%p227) target = $region40
        $region39: #{tpu_custom_call.1} parent=31 // pred_region
          %230 = dma.done %s223, 128
        $region40: #{tpu_custom_call.1} parent=31 // pred_fallthru
          _
        // Predicated region
        $region41: #{tpu_custom_call.1} parent=31 // pred_check
          %p231 = pneg %p108
        $region42: #{tpu_custom_call.1} parent=31 // pred_check_branch
          %233 = sbr.rel (%p231) target = $region44
        $region43: #{tpu_custom_call.1} parent=31 // pred_region
          %234 = dma.done [#allocation6], 2048
        $region44: #{tpu_custom_call.1} parent=31 // pred_fallthru
          _
        %s235 = sand.u32 %s43, 1
        %s236 = scalar_lea.sflag [#allocation3], %s235
        %s237 = sand.u32 %s43, 1
        %s238 = smul.addr %s237, 8
        %s239 = scalar_lea.vmem [#allocation2], %s238
        %p240 = pneg %p56
        %p241 = pneg %p53
        %s242 = sand.u32 %s23, 1
        %s243 = scalar_lea.sflag [#allocation6], %s242
        %s244 = sand.u32 %s69, 1
        %s245 = smul.addr %s244, 8
        %s246 = scalar_lea.vmem [#allocation5], %s245
        %p247 = pneg %p82
        %p248 = pneg %p79
        %p249 = pneg %p108
        %p250 = pneg %p105
        %p251 = pneg %p136
        %p252 = pneg %p133
        %s253 = sand.u32 %s123, 1
        %s254 = scalar_lea.sflag [#allocation4], %s253
        %s255 = sand.u32 %s123, 1
        %s256 = smul.addr %s255, 8
        %s257 = scalar_lea.vmem [#allocation8], %s256
        %v258 = vld [vmem:[%s226] sm:$0xff]
        %v259 = vld [vmem:[%s217] sm:$0xff]
        %v260 = vsub.f32 %v258, %v259
        %v261 = vld [vmem:[#allocation7] sm:$0xff]
        %v262 = vld [vmem:[#allocation7 + $0x8] sm:$0xff]
        %v263 = vld [vmem:[#allocation7 + $0x10] sm:$0xff]
        %v264 = vld [vmem:[#allocation7 + $0x18] sm:$0xff]
        %v265 = vld [vmem:[#allocation7 + $0x20] sm:$0xff]
        %v266 = vld [vmem:[#allocation7 + $0x28] sm:$0xff]
        %v267 = vld [vmem:[#allocation7 + $0x30] sm:$0xff]
        %v268 = vld [vmem:[#allocation7 + $0x38] sm:$0xff]
        %v269 = vld [vmem:[#allocation7 + $0x40] sm:$0xff]
        %v270 = vld [vmem:[#allocation7 + $0x48] sm:$0xff]
        %v271 = vld [vmem:[#allocation7 + $0x50] sm:$0xff]
        %v272 = vld [vmem:[#allocation7 + $0x58] sm:$0xff]
        %v273 = vld [vmem:[#allocation7 + $0x60] sm:$0xff]
        %v274 = vld [vmem:[#allocation7 + $0x68] sm:$0xff]
        %v275 = vld [vmem:[#allocation7 + $0x70] sm:$0xff]
        %v276 = vld [vmem:[#allocation7 + $0x78] sm:$0xff]
        %277 = vmatprep.subr.mxu0 0.0
        %278 = vmatpush1.msra.mxu0 %v261
        %279 = vmatprep.subr.mxu0 0.0
        %280 = vmatpush1.msra.mxu0 %v262
        %281 = vmatprep.subr.mxu0 0.0
        %282 = vmatpush1.msra.mxu0 %v263
        %283 = vmatprep.subr.mxu0 0.0
        %284 = vmatpush1.msra.mxu0 %v264
        %285 = vmatprep.subr.mxu0 0.0
        %286 = vmatpush1.msra.mxu0 %v265
        %287 = vmatprep.subr.mxu0 0.0
        %288 = vmatpush1.msra.mxu0 %v266
        %289 = vmatprep.subr.mxu0 0.0
        %290 = vmatpush1.msra.mxu0 %v267
        %291 = vmatprep.subr.mxu0 0.0
        %292 = vmatpush1.msra.mxu0 %v268
        %293 = vmatprep.subr.mxu0 0.0
        %294 = vmatpush1.msra.mxu0 %v269
        %295 = vmatprep.subr.mxu0 0.0
        %296 = vmatpush1.msra.mxu0 %v270
        %297 = vmatprep.subr.mxu0 0.0
        %298 = vmatpush1.msra.mxu0 %v271
        %299 = vmatprep.subr.mxu0 0.0
        %300 = vmatpush1.msra.mxu0 %v272
        %301 = vmatprep.subr.mxu0 0.0
        %302 = vmatpush1.msra.mxu0 %v273
        %303 = vmatprep.subr.mxu0 0.0
        %304 = vmatpush1.msra.mxu0 %v274
        %305 = vmatprep.subr.mxu0 0.0
        %306 = vmatpush1.msra.mxu0 %v275
        %307 = vmatprep.subr.mxu0 0.0
        %308 = vmatpush1.msra.mxu0 %v276
        %309 = vmatprep.subr.mxu0 0.0
        %310 = vmatpush1.msra.mxu0 0.0
        %311 = vmatprep.subr.mxu0 0.0
        %312 = vmatpush1.msra.mxu0 0.0
        %313 = vmatprep.subr.mxu0 0.0
        %314 = vmatpush1.msra.mxu0 0.0
        %315 = vmatprep.subr.mxu0 0.0
        %316 = vmatpush1.msra.mxu0 0.0
        %317 = vmatprep.subr.mxu0 0.0
        %318 = vmatpush1.msra.mxu0 0.0
        %319 = vmatprep.subr.mxu0 0.0
        %320 = vmatpush1.msra.mxu0 0.0
        %321 = vmatprep.subr.mxu0 0.0
        %322 = vmatpush1.msra.mxu0 0.0
        %323 = vmatprep.subr.mxu0 0.0
        %324 = vmatpush1.msra.mxu0 0.0
        %325 = vmatprep.subr.mxu0 0.0
        %326 = vmatpush1.msra.mxu0 0.0
        %327 = vmatprep.subr.mxu0 0.0
        %328 = vmatpush1.msra.mxu0 0.0
        %329 = vmatprep.subr.mxu0 0.0
        %330 = vmatpush1.msra.mxu0 0.0
        %331 = vmatprep.subr.mxu0 0.0
        %332 = vmatpush1.msra.mxu0 0.0
        %333 = vmatprep.subr.mxu0 0.0
        %334 = vmatpush1.msra.mxu0 0.0
        %335 = vmatprep.subr.mxu0 0.0
        %336 = vmatpush1.msra.mxu0 0.0
        %337 = vmatprep.subr.mxu0 0.0
        %338 = vmatpush1.msra.mxu0 0.0
        %339 = vmatprep.subr.mxu0 0.0
        %340 = vmatpush1.msra.mxu0 0.0
        %341 = vmatprep.mubr.f32.mxu0 0.0
        %342 = vmatmul.mubr.f32.gmra.mrb[0].mxu0 %v260
        %v343 = vpop.f32.mrb[0].mxu0
        %v344 = vadd.f32 0.0, %v343
        %v345 = vpop.f32.mrb[0].mxu0
        %346 = vdwg.mxu0
        %s347 = smul.u32 %s28, 128
        %s348 = sshra.s32 %s347, 7
        %s349 = sand.u32 %s347, 127
        %s350 = scalar_lea.vmem %s217, %s348 [#allocation2]
        %v351 = vld [vmem:[%s350] sm:$0xff]
        %v352 = vadd.f32 %v351, %v344
        %353 = vst [vmem:[%s257] sm:$0xff] %v352
        %s354 = sand.u32 %s123, 1
        %s355 = scalar_lea.sflag [#allocation4], %s354
        %s356 = sand.u32 %s123, 1
        %s357 = smul.addr %s356, 8
        %s358 = scalar_lea.vmem [#allocation8], %s357
        // Predicated region
        $region45: #{tpu_custom_call.1} parent=31 // pred_check
          %p359 = pneg %p133
        $region46: #{tpu_custom_call.1} parent=31 // pred_check_branch
          %361 = sbr.rel (%p359) target = $region48
        $region47: #{tpu_custom_call.1} parent=31 // pred_region
          %s363 = ssub.s32 128, 128
          %364 = vsyncadd %s355, %s363
          %s365 = sadd.s32 %s28, %s27
          %s366 = smul.addr %s365, 128
          %s367 = scalar_lea.hbm %s3, %s366
          %s369 = sshll.u32 %s358, 4
          %s370 = int_to_ptr.vmem [resolvable:$true] %s369
          %372 = dma.vmem_to_hbm [thread:$0]  %s370, 128, %s367, %s355
        $region48: #{tpu_custom_call.1} parent=31 // pred_fallthru
          _
      $region32: #{tpu_custom_call.1} parent=5 // pred_fallthru
        _
      %p373 = scmp.le.s32.totalorder 2, %s18
      // Predicated region
      $region49: #{tpu_custom_call.1} parent=5 // pred_check
        %p374 = pneg %p373
      $region50: #{tpu_custom_call.1} parent=5 // pred_check_branch
        %376 = sbr.rel (%p374) target = $region52
      $region51: #{tpu_custom_call.1} parent=5 // pred_region
        %s377 = ssub.s32 %s18, 2
        // Predicated region
        $region53: #{tpu_custom_call.1} parent=51 // pred_check
          %p378 = pneg %p139
        $region54: #{tpu_custom_call.1} parent=51 // pred_check_branch
          %380 = sbr.rel (%p378) target = $region56
        $region55: #{tpu_custom_call.1} parent=51 // pred_region
          %s381 = sand.u32 %s124, 1
          %s382 = scalar_lea.sflag [#allocation4], %s381
          %s383 = sand.u32 %s124, 1
          %s384 = smul.addr %s383, 8
          %s385 = scalar_lea.vmem [#allocation8], %s384
          %386 = dma.done %s382, 128
        $region56: #{tpu_custom_call.1} parent=51 // pred_fallthru
          _
      $region52: #{tpu_custom_call.1} parent=5 // pred_fallthru
        _
    $region6: #{tpu_custom_call.1} parent=1 // loop_footer
      %s22 = sadd.s32 1, %s18
    $region7: #{tpu_custom_call.1} parent=1 // loop_footer_branch
      %17 = sbr.rel target = $region3
    $region8: #{tpu_custom_call.1} parent=1 // loop_exit
      _
    %387 = vsyncpa [#allocation3], 1
    %s388 = scalar_lea.sflag [#allocation3], 1
    %389 = vsyncpa %s388, 1
    %390 = vsyncpa [#allocation6], 1
    %s391 = scalar_lea.sflag [#allocation6], 1
    %392 = vsyncpa %s391, 1
    %393 = vsyncpa [#allocation4], 1
    %s394 = scalar_lea.sflag [#allocation4], 1
    %395 = vsyncpa %s394, 1

// kernel: tpu_custom_call.1
$region0: #{tpu_custom_call.1}
  #allocation0 [shape = 'u32[]', space=smem, size = 0x4, offset = 0x4, fixed_abs, tag = 'smem constant byte address 0x4 - core index']
  #allocation1 [shape = 'u32[144,128]{1,0:T(1,128)}', space=vmem, size = 0x12000, scoped, tag = 'internal scratch']
  %s0 = inlined_call_operand.hbm [shape: f32[16,128], index: 0, kind: input, shape index: {}]
  %s1 = inlined_call_operand.hbm [shape: f32[16,128], index: 1, kind: input, shape index: {}]
  %s2 = inlined_call_operand.hbm [shape: f32[128,128], index: 2, kind: input, shape index: {}]
  %s3 = inlined_call_operand.hbm [shape: f32[16,128], index: 3, kind: output, shape index: {}]
  %s4 = sld [smem:[#allocation0]]
  $region57: #{tpu_custom_call.1} parent=0
    _
  %s6 = ssub.s32 1, %s4
  %s7 = scalar_select 0, %s6, %s4
  $region1: #{tpu_custom_call.1} parent=0
    #allocation2 [shape = 'u8[8192]{0}', space=vmem, size = 0x2000, scoped, tag = 'input window, operand 0']
    #allocation3 [shape = 's32[2]{0}', space=sflag, size = 0x8, scoped, tag = 'scoped memory for tpu_custom_call.1']
    #allocation4 [shape = 's32[2]{0}', space=sflag, size = 0x8, scoped, tag = 'scoped memory for tpu_custom_call.1']
    #allocation5 [shape = 'u8[8192]{0}', space=vmem, size = 0x2000, scoped, tag = 'input window, operand 1']
    #allocation6 [shape = 's32[2]{0}', space=sflag, size = 0x8, scoped, tag = 'scoped memory for tpu_custom_call.1']
    #allocation7 [shape = 'u8[65536]{0}', space=vmem, size = 0x10000, scoped, tag = 'input window, operand 2, single buffered']
    #allocation8 [shape = 'u8[8192]{0}', space=vmem, size = 0x2000, scoped, tag = 'output window, operand 0']
    %8 = vsyncpa [#allocation3], 0
    %s9 = scalar_lea.sflag [#allocation3], 1
    %10 = vsyncpa %s9, 0
    %11 = vsyncpa [#allocation6], 0
    %s12 = scalar_lea.sflag [#allocation6], 1
    %13 = vsyncpa %s12, 0
    %14 = vsyncpa [#allocation4], 0
    %s15 = scalar_lea.sflag [#allocation4], 1
    %16 = vsyncpa %s15, 0
    loop: start=0, step=1, limit=4
    $region2: #{tpu_custom_call.1} parent=1 // loop_pre_header
      _
    $region3: #{tpu_custom_call.1} parent=1 // loop_header
      %s18 = sphi 0, %s22
      %p19 = scmp.ge.s32.totalorder %s18, 4
      %s25 = sphi 0, %s37
      %s26 = sphi 0, %s33
      %s27 = sphi 0, %s25
      %s28 = sphi 0, %s26
      %s29 = sphi 0, %s27
      %s30 = sphi 0, %s28
      %s40 = sphi 0, %s42
      %s43 = sphi 0, %s40
      %s44 = sphi 0, %s43
      %s60 = sphi 0, %s44
      %s66 = sphi 0, %s68
      %s69 = sphi 0, %s66
      %s70 = sphi 0, %s69
      %s86 = sphi 0, %s70
      %s92 = sphi 0, %s94
      %s95 = sphi 0, %s92
      %s96 = sphi 0, %s95
      %s112 = sphi 0, %s96
      %s120 = sphi 0, %s122
      %s123 = sphi 0, %s120
      %s124 = sphi 0, %s123
      %s140 = sphi 0, %s124
    $region4: #{tpu_custom_call.1} parent=1 // loop_header_branch
      %21 = sbr.rel (%p19) target = $region8
    $region5: #{tpu_custom_call.1} parent=1 // loop_body
      %s23 = ssub.s32 %s18, 1
      %s24 = ssub.s32 %s18, 2
      %s31 = sadd.s32 1, %s26
      %p32 = scmp.ge.s32.totalorder %s31, 1
      %s33 = scalar_select %p32, 0, %s31
      %s34 = sadd.s32 1, %s25
      %s35 = scalar_select %p32, %s34, %s25
      %p36 = scmp.ge.s32.totalorder %s35, 2
      %s37 = scalar_select %p36, 0, %s35
      %s38 = ssub.s32 %s25, %s37
      %p39 = scmp.eq.s32.totalorder %s38, 0
      %s41 = sadd.s32 %s40, 1
      %s42 = scalar_select %p39, %s40, %s41
      %p45 = pneg %p39
      %p46 = scmp.eq.s32.totalorder %s18, 1
      %p47 = por %p45, %p46
      %p48 = scmp.ne.s32.totalorder %s40, %s43
      %p49 = scmp.eq.s32.totalorder %s18, 0
      %p50 = por %p48, %p49
      %p51 = scmp.ne.s32.totalorder %s40, %s43
      %p52 = scmp.eq.s32.totalorder %s23, 1
      %p53 = por %p51, %p52
      %p54 = scmp.ne.s32.totalorder %s43, %s44
      %p55 = scmp.eq.s32.totalorder %s23, 0
      %p56 = por %p54, %p55
      %p57 = scmp.ne.s32.totalorder %s43, %s44
      %p58 = scmp.eq.s32.totalorder %s24, 1
      %p59 = por %p57, %p58
      %p61 = scmp.ne.s32.totalorder %s44, %s60
      %p62 = scmp.eq.s32.totalorder %s24, 0
      %p63 = por %p61, %p62
      %s64 = ssub.s32 %s25, %s37
      %p65 = scmp.eq.s32.totalorder %s64, 0
      %s67 = sadd.s32 %s66, 1
      %s68 = scalar_select %p65, %s66, %s67
      %p71 = pneg %p65
      %p72 = scmp.eq.s32.totalorder %s18, 1
      %p73 = por %p71, %p72
      %p74 = scmp.ne.s32.totalorder %s66, %s69
      %p75 = scmp.eq.s32.totalorder %s18, 0
      %p76 = por %p74, %p75
      %p77 = scmp.ne.s32.totalorder %s66, %s69
      %p78 = scmp.eq.s32.totalorder %s23, 1
      %p79 = por %p77, %p78
      %p80 = scmp.ne.s32.totalorder %s69, %s70
      %p81 = scmp.eq.s32.totalorder %s23, 0
      %p82 = por %p80, %p81
      %p83 = scmp.ne.s32.totalorder %s69, %s70
      %p84 = scmp.eq.s32.totalorder %s24, 1
      %p85 = por %p83, %p84
      %p87 = scmp.ne.s32.totalorder %s70, %s86
      %p88 = scmp.eq.s32.totalorder %s24, 0
      %p89 = por %p87, %p88
      %s90 = ssub.s32 %s26, %s33
      %p91 = scmp.eq.s32.totalorder %s90, 0
      %s93 = sadd.s32 %s92, 1
      %s94 = scalar_select %p91, %s92, %s93
      %p97 = pneg %p91
      %p98 = scmp.eq.s32.totalorder %s18, 1
      %p99 = por %p97, %p98
      %p100 = scmp.ne.s32.totalorder %s92, %s95
      %p101 = scmp.eq.s32.totalorder %s18, 0
      %p102 = por %p100, %p101
      %p103 = scmp.ne.s32.totalorder %s92, %s95
      %p104 = scmp.eq.s32.totalorder %s23, 1
      %p105 = por %p103, %p104
      %p106 = scmp.ne.s32.totalorder %s95, %s96
      %p107 = scmp.eq.s32.totalorder %s23, 0
      %p108 = por %p106, %p107
      %p109 = scmp.ne.s32.totalorder %s95, %s96
      %p110 = scmp.eq.s32.totalorder %s24, 1
      %p111 = por %p109, %p110
      %p113 = scmp.ne.s32.totalorder %s96, %s112
      %p114 = scmp.eq.s32.totalorder %s24, 0
      %p115 = por %p113, %p114
      %s116 = ssub.s32 %s25, %s37
      %s117 = ssub.s32 %s26, %s33
      %s118 = sor.u32 %s116, %s117
      %p119 = scmp.eq.s32.totalorder %s118, 0
      %s121 = sadd.s32 %s120, 1
      %s122 = scalar_select %p119, %s120, %s121
      %p125 = pneg %p119
      %p126 = scmp.eq.s32.totalorder %s18, 1
      %p127 = por %p125, %p126
      %p128 = scmp.ne.s32.totalorder %s120, %s123
      %p129 = scmp.eq.s32.totalorder %s18, 0
      %p130 = por %p128, %p129
      %p131 = scmp.ne.s32.totalorder %s120, %s123
      %p132 = scmp.eq.s32.totalorder %s23, 1
      %p133 = por %p131, %p132
      %p134 = scmp.ne.s32.totalorder %s123, %s124
      %p135 = scmp.eq.s32.totalorder %s23, 0
      %p136 = por %p134, %p135
      %p137 = scmp.ne.s32.totalorder %s123, %s124
      %p138 = scmp.eq.s32.totalorder %s24, 1
      %p139 = por %p137, %p138
      %p141 = scmp.ne.s32.totalorder %s124, %s140
      %p142 = scmp.eq.s32.totalorder %s24, 0
      %p143 = por %p141, %p142
      %p144 = scmp.le.s32.totalorder 1, %s18
      %p145 = scmp.lt.s32.totalorder %s18, 3
      %p146 = pnand %p144, %p145
      %p147 = pneg %p146
      // Predicated region
      $region9: #{tpu_custom_call.1} parent=5 // pred_check
        _
      $region10: #{tpu_custom_call.1} parent=5 // pred_check_branch
        %149 = sbr.rel (%p146) target = $region12
      $region11: #{tpu_custom_call.1} parent=5 // pred_region
        %s150 = ssub.s32 %s18, 1
        // Predicated region
        $region13: #{tpu_custom_call.1} parent=11 // pred_check
          %p151 = pneg %p108
        $region14: #{tpu_custom_call.1} parent=11 // pred_check_branch
          %153 = sbr.rel (%p151) target = $region16
        $region15: #{tpu_custom_call.1} parent=11 // pred_region
          %s155 = ssub.s32 2048, 2048
          %156 = vsyncadd [#allocation6], %s155
          %s157 = smul.addr %s28, 128
          %s158 = scalar_lea.hbm %s2, %s157
          %s159 = sshll.u32 [#allocation7], 4
          %s160 = int_to_ptr.vmem [resolvable:$true] %s159
          %165 = dma.hbm_to_vmem [thread:$0]  %s158, 2048, %s160, [#allocation6], 128, 128, 8
        $region16: #{tpu_custom_call.1} parent=11 // pred_fallthru
          _
      $region12: #{tpu_custom_call.1} parent=5 // pred_fallthru
        _
      %p166 = scmp.lt.s32.totalorder %s18, 2
      // Predicated region
      $region17: #{tpu_custom_call.1} parent=5 // pred_check
        %p167 = pneg %p166
      $region18: #{tpu_custom_call.1} parent=5 // pred_check_branch
        %169 = sbr.rel (%p167) target = $region20
      $region19: #{tpu_custom_call.1} parent=5 // pred_region
        // Predicated region
        $region21: #{tpu_custom_call.1} parent=19 // pred_check
          %p170 = pneg %p50
        $region22: #{tpu_custom_call.1} parent=19 // pred_check_branch
          %172 = sbr.rel (%p170) target = $region24
        $region23: #{tpu_custom_call.1} parent=19 // pred_region
          %s173 = sand.u32 %s40, 1
          %s174 = scalar_lea.sflag [#allocation3], %s173
          %s175 = sand.u32 %s40, 1
          %s176 = smul.addr %s175, 8
          %s177 = scalar_lea.vmem [#allocation2], %s176
          %s179 = ssub.s32 128, 128
          %180 = vsyncadd %s174, %s179
          %s181 = smul.addr %s25, 128
          %s182 = scalar_lea.hbm %s0, %s181
          %s184 = sshll.u32 %s177, 4
          %s185 = int_to_ptr.vmem [resolvable:$true] %s184
          %187 = dma.hbm_to_vmem [thread:$0]  %s182, 128, %s185, %s174
        $region24: #{tpu_custom_call.1} parent=19 // pred_fallthru
          _
        // Predicated region
        $region25: #{tpu_custom_call.1} parent=19 // pred_check
          %p188 = pneg %p76
        $region26: #{tpu_custom_call.1} parent=19 // pred_check_branch
          %190 = sbr.rel (%p188) target = $region28
        $region27: #{tpu_custom_call.1} parent=19 // pred_region
          %s191 = sand.u32 %s18, 1
          %s192 = scalar_lea.sflag [#allocation6], %s191
          %s193 = sand.u32 %s66, 1
          %s194 = smul.addr %s193, 8
          %s195 = scalar_lea.vmem [#allocation5], %s194
          %s197 = ssub.s32 128, 128
          %198 = vsyncadd %s192, %s197
          %s199 = smul.addr %s25, 128
          %s200 = scalar_lea.hbm %s1, %s199
          %s202 = sshll.u32 %s195, 4
          %s203 = int_to_ptr.vmem [resolvable:$true] %s202
          %205 = dma.hbm_to_vmem [thread:$0]  %s200, 128, %s203, %s192
        $region28: #{tpu_custom_call.1} parent=19 // pred_fallthru
          _
      $region20: #{tpu_custom_call.1} parent=5 // pred_fallthru
        _
      %p206 = scmp.le.s32.totalorder 1, %s18
      %p207 = scmp.lt.s32.totalorder %s18, 3
      %p208 = pnand %p206, %p207
      %p209 = pneg %p208
      // Predicated region
      $region29: #{tpu_custom_call.1} parent=5 // pred_check
        _
      $region30: #{tpu_custom_call.1} parent=5 // pred_check_branch
        %211 = sbr.rel (%p208) target = $region32
      $region31: #{tpu_custom_call.1} parent=5 // pred_region
        %s212 = ssub.s32 %s18, 1
        %s213 = sand.u32 %s43, 1
        %s214 = scalar_lea.sflag [#allocation3], %s213
        %s215 = sand.u32 %s43, 1
        %s216 = smul.addr %s215, 8
        %s217 = scalar_lea.vmem [#allocation2], %s216
        // Predicated region
        $region33: #{tpu_custom_call.1} parent=31 // pred_check
          %p218 = pneg %p56
        $region34: #{tpu_custom_call.1} parent=31 // pred_check_branch
          %220 = sbr.rel (%p218) target = $region36
        $region35: #{tpu_custom_call.1} parent=31 // pred_region
          %221 = dma.done %s214, 128
        $region36: #{tpu_custom_call.1} parent=31 // pred_fallthru
          _
        %s222 = sand.u32 %s23, 1
        %s223 = scalar_lea.sflag [#allocation6], %s222
        %s224 = sand.u32 %s69, 1
        %s225 = smul.addr %s224, 8
        %s226 = scalar_lea.vmem [#allocation5], %s225
        // Predicated region
        $region37: #{tpu_custom_call.1} parent=31 // pred_check
          %p227 = pneg %p82
        $region38: #{tpu_custom_call.1} parent=31 // pred_check_branch
          %229 = sbr.rel (%p227) target = $region40
        $region39: #{tpu_custom_call.1} parent=31 // pred_region
          %230 = dma.done %s223, 128
        $region40: #{tpu_custom_call.1} parent=31 // pred_fallthru
          _
        // Predicated region
        $region41: #{tpu_custom_call.1} parent=31 // pred_check
          %p231 = pneg %p108
        $region42: #{tpu_custom_call.1} parent=31 // pred_check_branch
          %233 = sbr.rel (%p231) target = $region44
        $region43: #{tpu_custom_call.1} parent=31 // pred_region
          %234 = dma.done [#allocation6], 2048
        $region44: #{tpu_custom_call.1} parent=31 // pred_fallthru
          _
        %s235 = sand.u32 %s43, 1
        %s236 = scalar_lea.sflag [#allocation3], %s235
        %s237 = sand.u32 %s43, 1
        %s238 = smul.addr %s237, 8
        %s239 = scalar_lea.vmem [#allocation2], %s238
        %p240 = pneg %p56
        %p241 = pneg %p53
        %s242 = sand.u32 %s23, 1
        %s243 = scalar_lea.sflag [#allocation6], %s242
        %s244 = sand.u32 %s69, 1
        %s245 = smul.addr %s244, 8
        %s246 = scalar_lea.vmem [#allocation5], %s245
        %p247 = pneg %p82
        %p248 = pneg %p79
        %p249 = pneg %p108
        %p250 = pneg %p105
        %p251 = pneg %p136
        %p252 = pneg %p133
        %s253 = sand.u32 %s123, 1
        %s254 = scalar_lea.sflag [#allocation4], %s253
        %s255 = sand.u32 %s123, 1
        %s256 = smul.addr %s255, 8
        %s257 = scalar_lea.vmem [#allocation8], %s256
        %v258 = vld [vmem:[%s226] sm:$0xff]
        %v259 = vld [vmem:[%s217] sm:$0xff]
        %v260 = vsub.f32 %v258, %v259
        %v261 = vld [vmem:[#allocation7] sm:$0xff]
        %v262 = vld [vmem:[#allocation7 + $0x8] sm:$0xff]
        %v263 = vld [vmem:[#allocation7 + $0x10] sm:$0xff]
        %v264 = vld [vmem:[#allocation7 + $0x18] sm:$0xff]
        %v265 = vld [vmem:[#allocation7 + $0x20] sm:$0xff]
        %v266 = vld [vmem:[#allocation7 + $0x28] sm:$0xff]
        %v267 = vld [vmem:[#allocation7 + $0x30] sm:$0xff]
        %v268 = vld [vmem:[#allocation7 + $0x38] sm:$0xff]
        %v269 = vld [vmem:[#allocation7 + $0x40] sm:$0xff]
        %v270 = vld [vmem:[#allocation7 + $0x48] sm:$0xff]
        %v271 = vld [vmem:[#allocation7 + $0x50] sm:$0xff]
        %v272 = vld [vmem:[#allocation7 + $0x58] sm:$0xff]
        %v273 = vld [vmem:[#allocation7 + $0x60] sm:$0xff]
        %v274 = vld [vmem:[#allocation7 + $0x68] sm:$0xff]
        %v275 = vld [vmem:[#allocation7 + $0x70] sm:$0xff]
        %v276 = vld [vmem:[#allocation7 + $0x78] sm:$0xff]
        %277 = vmatprep.subr.mxu0 0.0
        %278 = vmatpush1.msra.mxu0 %v261
        %279 = vmatprep.subr.mxu0 0.0
        %280 = vmatpush1.msra.mxu0 %v262
        %281 = vmatprep.subr.mxu0 0.0
        %282 = vmatpush1.msra.mxu0 %v263
        %283 = vmatprep.subr.mxu0 0.0
        %284 = vmatpush1.msra.mxu0 %v264
        %285 = vmatprep.subr.mxu0 0.0
        %286 = vmatpush1.msra.mxu0 %v265
        %287 = vmatprep.subr.mxu0 0.0
        %288 = vmatpush1.msra.mxu0 %v266
        %289 = vmatprep.subr.mxu0 0.0
        %290 = vmatpush1.msra.mxu0 %v267
        %291 = vmatprep.subr.mxu0 0.0
        %292 = vmatpush1.msra.mxu0 %v268
        %293 = vmatprep.subr.mxu0 0.0
        %294 = vmatpush1.msra.mxu0 %v269
        %295 = vmatprep.subr.mxu0 0.0
        %296 = vmatpush1.msra.mxu0 %v270
        %297 = vmatprep.subr.mxu0 0.0
        %298 = vmatpush1.msra.mxu0 %v271
        %299 = vmatprep.subr.mxu0 0.0
        %300 = vmatpush1.msra.mxu0 %v272
        %301 = vmatprep.subr.mxu0 0.0
        %302 = vmatpush1.msra.mxu0 %v273
        %303 = vmatprep.subr.mxu0 0.0
        %304 = vmatpush1.msra.mxu0 %v274
        %305 = vmatprep.subr.mxu0 0.0
        %306 = vmatpush1.msra.mxu0 %v275
        %307 = vmatprep.subr.mxu0 0.0
        %308 = vmatpush1.msra.mxu0 %v276
        %309 = vmatprep.subr.mxu0 0.0
        %310 = vmatpush1.msra.mxu0 0.0
        %311 = vmatprep.subr.mxu0 0.0
        %312 = vmatpush1.msra.mxu0 0.0
        %313 = vmatprep.subr.mxu0 0.0
        %314 = vmatpush1.msra.mxu0 0.0
        %315 = vmatprep.subr.mxu0 0.0
        %316 = vmatpush1.msra.mxu0 0.0
        %317 = vmatprep.subr.mxu0 0.0
        %318 = vmatpush1.msra.mxu0 0.0
        %319 = vmatprep.subr.mxu0 0.0
        %320 = vmatpush1.msra.mxu0 0.0
        %321 = vmatprep.subr.mxu0 0.0
        %322 = vmatpush1.msra.mxu0 0.0
        %323 = vmatprep.subr.mxu0 0.0
        %324 = vmatpush1.msra.mxu0 0.0
        %325 = vmatprep.subr.mxu0 0.0
        %326 = vmatpush1.msra.mxu0 0.0
        %327 = vmatprep.subr.mxu0 0.0
        %328 = vmatpush1.msra.mxu0 0.0
        %329 = vmatprep.subr.mxu0 0.0
        %330 = vmatpush1.msra.mxu0 0.0
        %331 = vmatprep.subr.mxu0 0.0
        %332 = vmatpush1.msra.mxu0 0.0
        %333 = vmatprep.subr.mxu0 0.0
        %334 = vmatpush1.msra.mxu0 0.0
        %335 = vmatprep.subr.mxu0 0.0
        %336 = vmatpush1.msra.mxu0 0.0
        %337 = vmatprep.subr.mxu0 0.0
        %338 = vmatpush1.msra.mxu0 0.0
        %339 = vmatprep.subr.mxu0 0.0
        %340 = vmatpush1.msra.mxu0 0.0
        %341 = vmatprep.mubr.f32.mxu0 0.0
        %342 = vmatmul.mubr.f32.gmra.mrb[0].mxu0 %v260
        %v343 = vpop.f32.mrb[0].mxu0
        %v344 = vadd.f32 0.0, %v343
        %v345 = vpop.f32.mrb[0].mxu0
        %346 = vdwg.mxu0
        %s347 = smul.u32 %s28, 128
        %s348 = sshra.s32 %s347, 7
        %s349 = sand.u32 %s347, 127
        %s350 = scalar_lea.vmem %s217, %s348 [#allocation2]
        %v351 = vld [vmem:[%s350] sm:$0xff]
        %v352 = vadd.f32 %v351, %v344
        %353 = vst [vmem:[%s257] sm:$0xff] %v352
        %s354 = sand.u32 %s123, 1
        %s355 = scalar_lea.sflag [#allocation4], %s354
        %s356 = sand.u32 %s123, 1
        %s357 = smul.addr %s356, 8
        %s358 = scalar_lea.vmem [#allocation8], %s357
        // Predicated region
        $region45: #{tpu_custom_call.1} parent=31 // pred_check
          %p359 = pneg %p133
        $region46: #{tpu_custom_call.1} parent=31 // pred_check_branch
          %361 = sbr.rel (%p359) target = $region48
        $region47: #{tpu_custom_call.1} parent=31 // pred_region
          %s363 = ssub.s32 128, 128
          %364 = vsyncadd %s355, %s363
          %s365 = sadd.s32 %s28, %s27
          %s366 = smul.addr %s365, 128
          %s367 = scalar_lea.hbm %s3, %s366
          %s369 = sshll.u32 %s358, 4
          %s370 = int_to_ptr.vmem [resolvable:$true] %s369
          %372 = dma.vmem_to_hbm [thread:$0]  %s370, 128, %s367, %s355
        $region48: #{tpu_custom_call.1} parent=31 // pred_fallthru
          _
      $region32: #{tpu_custom_call.1} parent=5 // pred_fallthru
        _
      %p373 = scmp.le.s32.totalorder 2, %s18
      // Predicated region
      $region49: #{tpu_custom_call.1} parent=5 // pred_check
        %p374 = pneg %p373
      $region50: #{tpu_custom_call.1} parent=5 // pred_check_branch
        %376 = sbr.rel (%p374) target = $region52
      $region51: #{tpu_custom_call.1} parent=5 // pred_region
        %s377 = ssub.s32 %s18, 2
        // Predicated region
        $region53: #{tpu_custom_call.1} parent=51 // pred_check
          %p378 = pneg %p139
        $region54: #{tpu_custom_call.1} parent=51 // pred_check_branch
          %380 = sbr.rel (%p378) target = $region56
        $region55: #{tpu_custom_call.1} parent=51 // pred_region
          %s381 = sand.u32 %s124, 1
          %s382 = scalar_lea.sflag [#allocation4], %s381
          %s383 = sand.u32 %s124, 1
          %s384 = smul.addr %s383, 8
          %s385 = scalar_lea.vmem [#allocation8], %s384
          %386 = dma.done %s382, 128
        $region56: #{tpu_custom_call.1} parent=51 // pred_fallthru
          _
      $region52: #{tpu_custom_call.1} parent=5 // pred_fallthru
        _
    $region6: #{tpu_custom_call.1} parent=1 // loop_footer
      %s22 = sadd.s32 1, %s18
    $region7: #{tpu_custom_call.1} parent=1 // loop_footer_branch
      %17 = sbr.rel target = $region3
    $region8: #{tpu_custom_call.1} parent=1 // loop_exit
      _
    %387 = vsyncpa [#allocation3], 1
    %s388 = scalar_lea.sflag [#allocation3], 1
    %389 = vsyncpa %s388, 1
    %390 = vsyncpa [#allocation6], 1
    %s391 = scalar_lea.sflag [#allocation6], 1
    %392 = vsyncpa %s391, 1
    %393 = vsyncpa [#allocation4], 1
    %s394 = scalar_lea.sflag [#allocation4], 1
    %395 = vsyncpa %s394, 1

</llo_original>
